<compile_context>
chip_gen: v7x
topology: tpu7x:2x2x1
jax: 0.10.0
libtpu: 0.0.40
codegen_flags: <defaults>
</compile_context>

<pallas_src>
import jax
import jax.numpy as jnp
from jax.experimental import pallas as pl
from jax.experimental.pallas import tpu as pltpu


# ----------------------------------------------------------------------------
# Pure-JAX reference (mirrors torch semantics exactly, incl. torch.pow corner
# cases: negative base w/ integer exponent, NaN for negative**non-integer, 0**x).
# ----------------------------------------------------------------------------
def _torch_pow(base, exponent):
    abs_base = jnp.abs(base)
    mag = jnp.exp(exponent * jnp.log(abs_base))
    exp_rounded = jnp.round(exponent)
    is_int = exponent == exp_rounded
    is_odd = jnp.abs(jnp.mod(exp_rounded, 2.0)) == 1.0
    neg = base < 0.0
    signed = jnp.where(neg & is_odd, -mag, mag)
    res = jnp.where(neg & jnp.logical_not(is_int), jnp.float32(jnp.nan), signed)
    zero = base == 0.0
    zero_val = jnp.where(exponent == 0.0, jnp.float32(1.0),
                         jnp.where(exponent > 0.0, jnp.float32(0.0),
                                   jnp.float32(jnp.inf)))
    return jnp.where(zero, zero_val, res)


def complex_reference(pred, variables, exponents):
    p = pred.astype(jnp.float32)
    x1 = jnp.exp(p)
    pred2 = jnp.stack([p, x1], axis=-1)                       # (B, C, 2)
    pred2 = _torch_pow(pred2, jnp.log2(2.0 + exponents))      # broadcast (1,C,2)
    pred2 = pred2 * variables
    full = jnp.concatenate([p[..., None], pred2], axis=-1)    # (B, C, 3)
    return jnp.sum(full, axis=-1)


# ----------------------------------------------------------------------------
# Kernel
# ----------------------------------------------------------------------------
def complex_kernel(pred_ref, par_ref, out_ref):
    # pred block: (TB, TC); parameter block: (8, TC), rows broadcast over batch.
    p = pred_ref[...].astype(jnp.float32)

    v0      = par_ref[0:1, :]   # variables[..., 0]
    v1      = par_ref[1:2, :]   # variables[..., 1]
    g0      = par_ref[2:3, :]   # log2(2 + exponents[..., 0])
    g1      = par_ref[3:4, :]   # log2(2 + exponents[..., 1])
    v0_neg  = par_ref[4:5, :]   # v0 * (-1 / +1 / NaN)  for negative base ** g0
    v0_zero = par_ref[5:6, :]   # v0 * (0 ** g0)

    # t1 = v1 * exp(p) ** g1 == v1 * exp(p * g1)   (base > 0 -> no special cases)
    t1 = v1 * jnp.exp(p * g1)

    # t0 = v0 * torch.pow(p, g0). Per-class constants hoisted into the params;
    # only (TB,TC)-shaped abs/log/exp/selects + ONE multiply remain in-loop.
    mag = jnp.exp(g0 * jnp.log(jnp.abs(p)))
    coeff = jnp.where(p < 0.0, v0_neg, v0)          # select BEFORE multiply (NaN-safe)
    t0 = jnp.where(p == 0.0, v0_zero, mag * coeff)

    out_ref[...] = (p + t0 + t1).astype(out_ref.dtype)


# ----------------------------------------------------------------------------
# Tile selection: lane-dense, sublane-aligned, VMEM-budgeted, >=2 blocks when
# possible so both v7x TensorCores get work.
# ----------------------------------------------------------------------------
def _choose_tiles(B, C, itemsize, tile_b, tile_c):
    sub = 16 if itemsize == 2 else 8                 # min sublane tile (bf16 / f32)

    if C % 128 == 0:
        tc = max(128, (min(tile_c, C) // 128) * 128)
    else:
        tc = C                                       # full dim -> always legal
    if B % sub == 0:
        tb = max(sub, (min(tile_b, B) // sub) * sub)
    else:
        tb = B                                       # full dim -> always legal

    # Keep live block VMEM (in + out, double-buffered) under ~24 MiB for v7x.
    max_live = 24 << 20
    while 4 * tb * tc * itemsize > max_live:
        if tc % 256 == 0 and tc > 128:
            tc //= 2
        elif tb > sub and (tb // 2) % sub == 0:
            tb //= 2
        else:
            break

    # v7x has 2 TensorCores: avoid a (1, 1) grid if we can cheaply split.
    if pl.cdiv(C, tc) * pl.cdiv(B, tb) == 1:
        if tc % 256 == 0:
            tc //= 2
        elif tb % (2 * sub) == 0:
            tb //= 2

    return tb, tc


# ----------------------------------------------------------------------------
# Wrapper
# ----------------------------------------------------------------------------
def complex_forward(pred, variables, exponents, *, tile_b=512, tile_c=1024):
    """pred: (B, C) float (f32 or bf16); variables/exponents: (1, C, 2)."""
    B, C = pred.shape
    v = variables.reshape(C, 2).astype(jnp.float32)
    e = exponents.reshape(C, 2).astype(jnp.float32)

    # Precompute everything that only depends on the per-class parameters.
    g0 = jnp.log2(2.0 + e[:, 0])
    g1 = jnp.log2(2.0 + e[:, 1])
    g0_round = jnp.round(g0)
    is_int = g0 == g0_round
    is_odd = jnp.abs(jnp.mod(g0_round, 2.0)) == 1.0
    neg_mult = jnp.where(is_int, jnp.where(is_odd, -1.0, 1.0),
                         jnp.float32(jnp.nan))
    zero_val = jnp.where(g0 == 0.0, 1.0,
                         jnp.where(g0 > 0.0, 0.0, jnp.float32(jnp.inf)))
    v0, v1 = v[:, 0], v[:, 1]
    pad = jnp.zeros((C,), jnp.float32)
    params = jnp.stack(                              # (8, C) sublane-dense, one DMA
        [v0, v1, g0, g1, v0 * neg_mult, v0 * zero_val, pad, pad],
        axis=0).astype(jnp.float32)

    itemsize = jnp.dtype(pred.dtype).itemsize
    tb, tc = _choose_tiles(B, C, itemsize, tile_b, tile_c)

    # Class axis OUTER, batch axis INNER (fastest): the param block index is
    # constant across the inner sweep, so Pallas skips re-DMAing it.
    grid = (pl.cdiv(C, tc), pl.cdiv(B, tb))
    pred_spec = pl.BlockSpec((tb, tc), lambda jc, ib: (ib, jc))
    par_spec = pl.BlockSpec((8, tc), lambda jc, ib: (0, jc))

    # Explicit VMEM budget (v5e scoped default is 16 MiB; v7x physical is 64 MiB).
    live_bytes = 2 * (2 * tb * tc * itemsize) + 2 * (8 * tc * 4)
    vmem_limit = int(min(max(2 * live_bytes, 24 << 20), 48 << 20))

    cost = pl.CostEstimate(
        flops=12 * B * C,
        transcendentals=3 * B * C,
        bytes_accessed=2 * B * C * itemsize + 32 * C,
    )

    return pl.pallas_call(
        complex_kernel,
        out_shape=jax.ShapeDtypeStruct((B, C), pred.dtype),
        grid_spec=pltpu.PrefetchScalarGridSpec(
            num_scalar_prefetch=0,
            grid=grid,
            in_specs=[pred_spec, par_spec],
            out_specs=pred_spec,
        ),
        compiler_params=pltpu.CompilerParams(
            dimension_semantics=("parallel", "parallel"),
            vmem_limit_bytes=vmem_limit,
        ),
        cost_estimate=cost,
    )(pred, params)


# ----------------------------------------------------------------------------
# Demo / correctness check
# ----------------------------------------------------------------------------
if __name__ == "__main__":
    key = jax.random.PRNGKey(0)
    B, C = 8, 256  # batch, outclasses

    pred = jax.random.normal(key, (B, C), dtype=jnp.float32)

    # Test 1: parameters exactly as the module's __init__ (ones / zeros).
    variables = jnp.ones((1, C, 2), dtype=jnp.float32)
    exponents = jnp.zeros((1, C, 2), dtype=jnp.float32)
    out = jax.block_until_ready(complex_forward(pred, variables, exponents))
    ref = complex_reference(pred, variables, exponents)
    assert out.shape == (B, C) and out.dtype == jnp.float32
    assert jnp.allclose(out, ref, rtol=1e-5, atol=1e-5), "mismatch (default params)"

    # Test 2: non-trivial parameters (exercises pow special cases incl. the
    # NaN branch for negative base ** non-integer exponent, same as torch).
    k1, k2 = jax.random.split(key)
    variables2 = 1.0 + 0.1 * jax.random.normal(k1, (1, C, 2), dtype=jnp.float32)
    exponents2 = jax.random.uniform(k2, (1, C, 2), dtype=jnp.float32,
                                    minval=-0.5, maxval=1.5)
    out2 = jax.block_until_ready(complex_forward(pred, variables2, exponents2))
    ref2 = complex_reference(pred, variables2, exponents2)
    assert jnp.allclose(out2, ref2, rtol=1e-4, atol=1e-5, equal_nan=True), \
        "mismatch (random params)"

    # Test 3: native bf16 I/O path (compute stays f32 inside the kernel).
    pred_bf16 = pred.astype(jnp.bfloat16)
    out3 = jax.block_until_ready(complex_forward(pred_bf16, variables, exponents))
    ref3 = complex_reference(pred_bf16.astype(jnp.float32), variables, exponents)
    assert out3.shape == (B, C) and out3.dtype == jnp.bfloat16
    assert jnp.allclose(out3.astype(jnp.float32), ref3, rtol=3e-2, atol=3e-2), \
        "mismatch (bf16 I/O)"

    print("KERNEL_OK")
</pallas_src>

<mosaic_0001>
module attributes {stable_mosaic.version = 11 : i64} {
  func.func @complex_kernel(%arg0: i32, %arg1: i32, %arg2: memref<8x128xf32, #tpu.memory_space<vmem>>, %arg3: memref<8x128xf32, #tpu.memory_space<vmem>>, %arg4: memref<8x128xf32, #tpu.memory_space<vmem>>) attributes {dimension_semantics = [#tpu.dimension_semantics<parallel>, #tpu.dimension_semantics<parallel>], iteration_bounds = array<i64: 2, 1>, scalar_prefetch = 0 : i64, scratch_operands = 0 : i64, tpu.core_type = #tpu.core_type<tc>, window_params = [{transform_indices = @transform_0, window_bounds = array<i64: 8, 128>}, {transform_indices = @transform_1, window_bounds = array<i64: 8, 128>}, {transform_indices = @transform_2, window_bounds = array<i64: 8, 128>}]} {
    %c0 = arith.constant 0 : index
    %c0_0 = arith.constant 0 : index
    %0 = vector.load %arg2[%c0, %c0_0] : memref<8x128xf32, #tpu.memory_space<vmem>>, vector<8x128xf32>
    %c0_1 = arith.constant 0 : index
    %c0_2 = arith.constant 0 : index
    %1 = vector.load %arg3[%c0_1, %c0_2] : memref<8x128xf32, #tpu.memory_space<vmem>>, vector<1x128xf32>
    %c1 = arith.constant 1 : index
    %c0_3 = arith.constant 0 : index
    %2 = vector.load %arg3[%c1, %c0_3] : memref<8x128xf32, #tpu.memory_space<vmem>>, vector<1x128xf32>
    %c2 = arith.constant 2 : index
    %c0_4 = arith.constant 0 : index
    %3 = vector.load %arg3[%c2, %c0_4] : memref<8x128xf32, #tpu.memory_space<vmem>>, vector<1x128xf32>
    %c3 = arith.constant 3 : index
    %c0_5 = arith.constant 0 : index
    %4 = vector.load %arg3[%c3, %c0_5] : memref<8x128xf32, #tpu.memory_space<vmem>>, vector<1x128xf32>
    %c4 = arith.constant 4 : index
    %c0_6 = arith.constant 0 : index
    %5 = vector.load %arg3[%c4, %c0_6] : memref<8x128xf32, #tpu.memory_space<vmem>>, vector<1x128xf32>
    %c5 = arith.constant 5 : index
    %c0_7 = arith.constant 0 : index
    %6 = vector.load %arg3[%c5, %c0_7] : memref<8x128xf32, #tpu.memory_space<vmem>>, vector<1x128xf32>
    %7 = vector.broadcast %4 : vector<1x128xf32> to vector<8x128xf32>
    %8 = arith.mulf %0, %7 : vector<8x128xf32>
    %9 = math.exp %8 : vector<8x128xf32>
    %10 = vector.broadcast %2 : vector<1x128xf32> to vector<8x128xf32>
    %11 = arith.mulf %10, %9 : vector<8x128xf32>
    %12 = math.absf %0 : vector<8x128xf32>
    %13 = math.log %12 : vector<8x128xf32>
    %14 = vector.broadcast %3 : vector<1x128xf32> to vector<8x128xf32>
    %15 = arith.mulf %14, %13 : vector<8x128xf32>
    %16 = math.exp %15 : vector<8x128xf32>
    %cst = arith.constant 0.000000e+00 : f32
    %17 = vector.broadcast %cst : f32 to vector<8x128xf32>
    %18 = arith.cmpf olt, %0, %17 : vector<8x128xf32>
    %19 = vector.shape_cast %5 : vector<1x128xf32> to vector<1x128xf32>
    %20 = vector.broadcast %19 : vector<1x128xf32> to vector<8x128xf32>
    %21 = vector.shape_cast %1 : vector<1x128xf32> to vector<1x128xf32>
    %22 = vector.broadcast %21 : vector<1x128xf32> to vector<8x128xf32>
    %23 = arith.select %18, %20, %22 : vector<8x128xi1>, vector<8x128xf32>
    %cst_8 = arith.constant 0.000000e+00 : f32
    %24 = vector.broadcast %cst_8 : f32 to vector<8x128xf32>
    %25 = arith.cmpf oeq, %0, %24 : vector<8x128xf32>
    %26 = arith.mulf %16, %23 : vector<8x128xf32>
    %27 = vector.shape_cast %6 : vector<1x128xf32> to vector<1x128xf32>
    %28 = vector.broadcast %27 : vector<1x128xf32> to vector<8x128xf32>
    %29 = arith.select %25, %28, %26 : vector<8x128xi1>, vector<8x128xf32>
    %30 = arith.addf %0, %29 : vector<8x128xf32>
    %31 = arith.addf %30, %11 : vector<8x128xf32>
    %c0_9 = arith.constant 0 : index
    %c0_10 = arith.constant 0 : index
    %32 = vector.load %arg4[%c0_9, %c0_10] : memref<8x128xf32, #tpu.memory_space<vmem>>, vector<8x128xf32>
    tpu.vector_store %arg4[%c0_9, %c0_10], %31 {strides = array<i32>} : memref<8x128xf32, #tpu.memory_space<vmem>>, vector<8x128xf32>,
    return
  }
  func.func @transform_0(%arg0: i32, %arg1: i32) -> (i32, i32) {
    %c0_i32 = arith.constant 0 : i32
    return %arg1, %arg0 : i32, i32
  }
  func.func @transform_1(%arg0: i32, %arg1: i32) -> (i32, i32) {
    %c0_i32 = arith.constant 0 : i32
    %c0_i32_0 = arith.constant 0 : i32
    return %c0_i32, %arg0 : i32, i32
  }
  func.func @transform_2(%arg0: i32, %arg1: i32) -> (i32, i32) {
    %c0_i32 = arith.constant 0 : i32
    return %arg1, %arg0 : i32, i32
  }
}

</mosaic_0001>

<llo_original>
// kernel: tpu_custom_call.1
$region0: #{tpu_custom_call.1}
  #allocation0 [shape = 'u32[]', space=smem, size = 0x4, offset = 0x4, fixed_abs, tag = 'smem constant byte address 0x4 - core index']
  #allocation1 [shape = 'u32[144,128]{1,0:T(1,128)}', space=vmem, size = 0x12000, scoped, tag = 'internal scratch']
  %s0 = inlined_call_operand.hbm [shape: f32[8,256], index: 0, kind: input, shape index: {}]
  %s1 = inlined_call_operand.hbm [shape: f32[8,256], index: 1, kind: input, shape index: {}]
  %s2 = inlined_call_operand.hbm [shape: f32[8,256], index: 2, kind: output, shape index: {}]
  %s3 = sld [smem:[#allocation0]]
  $region49: #{tpu_custom_call.1} parent=0
    _
  %s5 = ssub.s32 1, %s3
  %s6 = scalar_select 0, %s5, %s3
  $region1: #{tpu_custom_call.1} parent=0
    #allocation2 [shape = 'u8[8192]{0}', space=vmem, size = 0x2000, scoped, tag = 'input window, operand 0']
    #allocation3 [shape = 's32[2]{0}', space=sflag, size = 0x8, scoped, tag = 'scoped memory for tpu_custom_call.1']
    #allocation4 [shape = 's32[2]{0}', space=sflag, size = 0x8, scoped, tag = 'scoped memory for tpu_custom_call.1']
    #allocation5 [shape = 'u8[8192]{0}', space=vmem, size = 0x2000, scoped, tag = 'input window, operand 1']
    #allocation6 [shape = 's32[2]{0}', space=sflag, size = 0x8, scoped, tag = 'scoped memory for tpu_custom_call.1']
    #allocation7 [shape = 'u8[8192]{0}', space=vmem, size = 0x2000, scoped, tag = 'output window, operand 0']
    %7 = vsyncpa [#allocation3], 0
    %s8 = scalar_lea.sflag [#allocation3], 1
    %9 = vsyncpa %s8, 0
    %10 = vsyncpa [#allocation6], 0
    %s11 = scalar_lea.sflag [#allocation6], 1
    %12 = vsyncpa %s11, 0
    %13 = vsyncpa [#allocation4], 0
    %s14 = scalar_lea.sflag [#allocation4], 1
    %15 = vsyncpa %s14, 0
    loop: start=0, step=1, limit=4
    $region2: #{tpu_custom_call.1} parent=1 // loop_pre_header
      _
    $region3: #{tpu_custom_call.1} parent=1 // loop_header
      %s17 = sphi 0, %s21
      %p18 = scmp.ge.s32.totalorder %s17, 4
      %s24 = sphi 0, %s36
      %s25 = sphi 0, %s32
      %s26 = sphi 0, %s24
      %s27 = sphi 0, %s25
      %s28 = sphi 0, %s26
      %s29 = sphi 0, %s27
      %s41 = sphi 0, %s43
      %s44 = sphi 0, %s41
      %s45 = sphi 0, %s44
      %s61 = sphi 0, %s45
      %s67 = sphi 0, %s69
      %s70 = sphi 0, %s67
      %s71 = sphi 0, %s70
      %s87 = sphi 0, %s71
      %s95 = sphi 0, %s97
      %s98 = sphi 0, %s95
      %s99 = sphi 0, %s98
      %s115 = sphi 0, %s99
    $region4: #{tpu_custom_call.1} parent=1 // loop_header_branch
      %20 = sbr.rel (%p18) target = $region8
    $region5: #{tpu_custom_call.1} parent=1 // loop_body
      %s22 = ssub.s32 %s17, 1
      %s23 = ssub.s32 %s17, 2
      %s30 = sadd.s32 1, %s25
      %p31 = scmp.ge.s32.totalorder %s30, 1
      %s32 = scalar_select %p31, 0, %s30
      %s33 = sadd.s32 1, %s24
      %s34 = scalar_select %p31, %s33, %s24
      %p35 = scmp.ge.s32.totalorder %s34, 2
      %s36 = scalar_select %p35, 0, %s34
      %s37 = ssub.s32 %s25, %s32
      %s38 = ssub.s32 %s24, %s36
      %s39 = sor.u32 %s37, %s38
      %p40 = scmp.eq.s32.totalorder %s39, 0
      %s42 = sadd.s32 %s41, 1
      %s43 = scalar_select %p40, %s41, %s42
      %p46 = pneg %p40
      %p47 = scmp.eq.s32.totalorder %s17, 1
      %p48 = por %p46, %p47
      %p49 = scmp.ne.s32.totalorder %s41, %s44
      %p50 = scmp.eq.s32.totalorder %s17, 0
      %p51 = por %p49, %p50
      %p52 = scmp.ne.s32.totalorder %s41, %s44
      %p53 = scmp.eq.s32.totalorder %s22, 1
      %p54 = por %p52, %p53
      %p55 = scmp.ne.s32.totalorder %s44, %s45
      %p56 = scmp.eq.s32.totalorder %s22, 0
      %p57 = por %p55, %p56
      %p58 = scmp.ne.s32.totalorder %s44, %s45
      %p59 = scmp.eq.s32.totalorder %s23, 1
      %p60 = por %p58, %p59
      %p62 = scmp.ne.s32.totalorder %s45, %s61
      %p63 = scmp.eq.s32.totalorder %s23, 0
      %p64 = por %p62, %p63
      %s65 = ssub.s32 %s24, %s36
      %p66 = scmp.eq.s32.totalorder %s65, 0
      %s68 = sadd.s32 %s67, 1
      %s69 = scalar_select %p66, %s67, %s68
      %p72 = pneg %p66
      %p73 = scmp.eq.s32.totalorder %s17, 1
      %p74 = por %p72, %p73
      %p75 = scmp.ne.s32.totalorder %s67, %s70
      %p76 = scmp.eq.s32.totalorder %s17, 0
      %p77 = por %p75, %p76
      %p78 = scmp.ne.s32.totalorder %s67, %s70
      %p79 = scmp.eq.s32.totalorder %s22, 1
      %p80 = por %p78, %p79
      %p81 = scmp.ne.s32.totalorder %s70, %s71
      %p82 = scmp.eq.s32.totalorder %s22, 0
      %p83 = por %p81, %p82
      %p84 = scmp.ne.s32.totalorder %s70, %s71
      %p85 = scmp.eq.s32.totalorder %s23, 1
      %p86 = por %p84, %p85
      %p88 = scmp.ne.s32.totalorder %s71, %s87
      %p89 = scmp.eq.s32.totalorder %s23, 0
      %p90 = por %p88, %p89
      %s91 = ssub.s32 %s25, %s32
      %s92 = ssub.s32 %s24, %s36
      %s93 = sor.u32 %s91, %s92
      %p94 = scmp.eq.s32.totalorder %s93, 0
      %s96 = sadd.s32 %s95, 1
      %s97 = scalar_select %p94, %s95, %s96
      %p100 = pneg %p94
      %p101 = scmp.eq.s32.totalorder %s17, 1
      %p102 = por %p100, %p101
      %p103 = scmp.ne.s32.totalorder %s95, %s98
      %p104 = scmp.eq.s32.totalorder %s17, 0
      %p105 = por %p103, %p104
      %p106 = scmp.ne.s32.totalorder %s95, %s98
      %p107 = scmp.eq.s32.totalorder %s22, 1
      %p108 = por %p106, %p107
      %p109 = scmp.ne.s32.totalorder %s98, %s99
      %p110 = scmp.eq.s32.totalorder %s22, 0
      %p111 = por %p109, %p110
      %p112 = scmp.ne.s32.totalorder %s98, %s99
      %p113 = scmp.eq.s32.totalorder %s23, 1
      %p114 = por %p112, %p113
      %p116 = scmp.ne.s32.totalorder %s99, %s115
      %p117 = scmp.eq.s32.totalorder %s23, 0
      %p118 = por %p116, %p117
      %p119 = scmp.le.s32.totalorder 1, %s17
      %p120 = scmp.lt.s32.totalorder %s17, 3
      %p121 = pnand %p119, %p120
      %p122 = pneg %p121
      // Predicated region
      $region9: #{tpu_custom_call.1} parent=5 // pred_check
        _
      $region10: #{tpu_custom_call.1} parent=5 // pred_check_branch
        %124 = sbr.rel (%p121) target = $region12
      $region11: #{tpu_custom_call.1} parent=5 // pred_region
        %s125 = ssub.s32 %s17, 1
      $region12: #{tpu_custom_call.1} parent=5 // pred_fallthru
        _
      %p126 = scmp.lt.s32.totalorder %s17, 2
      // Predicated region
      $region13: #{tpu_custom_call.1} parent=5 // pred_check
        %p127 = pneg %p126
      $region14: #{tpu_custom_call.1} parent=5 // pred_check_branch
        %129 = sbr.rel (%p127) target = $region16
      $region15: #{tpu_custom_call.1} parent=5 // pred_region
        // Predicated region
        $region17: #{tpu_custom_call.1} parent=15 // pred_check
          %p130 = pneg %p51
        $region18: #{tpu_custom_call.1} parent=15 // pred_check_branch
          %132 = sbr.rel (%p130) target = $region20
        $region19: #{tpu_custom_call.1} parent=15 // pred_region
          %s133 = sand.u32 %s41, 1
          %s134 = scalar_lea.sflag [#allocation3], %s133
          %s135 = sand.u32 %s41, 1
          %s136 = smul.addr %s135, 8
          %s137 = scalar_lea.vmem [#allocation2], %s136
          %s139 = ssub.s32 128, 128
          %140 = vsyncadd %s134, %s139
          %s141 = smul.addr %s25, 2
          %s142 = sadd.s32 %s24, %s141
          %s143 = smul.addr %s142, 128
          %s144 = scalar_lea.hbm %s0, %s143
          %s146 = sshll.u32 %s137, 4
          %s147 = int_to_ptr.vmem [resolvable:$true] %s146
          %149 = dma.hbm_to_vmem [thread:$0]  %s144, 128, %s147, %s134
        $region20: #{tpu_custom_call.1} parent=15 // pred_fallthru
          _
        // Predicated region
        $region21: #{tpu_custom_call.1} parent=15 // pred_check
          %p150 = pneg %p77
        $region22: #{tpu_custom_call.1} parent=15 // pred_check_branch
          %152 = sbr.rel (%p150) target = $region24
        $region23: #{tpu_custom_call.1} parent=15 // pred_region
          %s153 = sand.u32 %s67, 1
          %s154 = scalar_lea.sflag [#allocation6], %s153
          %s155 = sand.u32 %s67, 1
          %s156 = smul.addr %s155, 8
          %s157 = scalar_lea.vmem [#allocation5], %s156
          %s159 = ssub.s32 128, 128
          %160 = vsyncadd %s154, %s159
          %s161 = smul.addr %s24, 128
          %s162 = scalar_lea.hbm %s1, %s161
          %s164 = sshll.u32 %s157, 4
          %s165 = int_to_ptr.vmem [resolvable:$true] %s164
          %167 = dma.hbm_to_vmem [thread:$0]  %s162, 128, %s165, %s154
        $region24: #{tpu_custom_call.1} parent=15 // pred_fallthru
          _
      $region16: #{tpu_custom_call.1} parent=5 // pred_fallthru
        _
      %p168 = scmp.le.s32.totalorder 1, %s17
      %p169 = scmp.lt.s32.totalorder %s17, 3
      %p170 = pnand %p168, %p169
      %p171 = pneg %p170
      // Predicated region
      $region25: #{tpu_custom_call.1} parent=5 // pred_check
        _
      $region26: #{tpu_custom_call.1} parent=5 // pred_check_branch
        %173 = sbr.rel (%p170) target = $region28
      $region27: #{tpu_custom_call.1} parent=5 // pred_region
        %s174 = ssub.s32 %s17, 1
        %s175 = sand.u32 %s44, 1
        %s176 = scalar_lea.sflag [#allocation3], %s175
        %s177 = sand.u32 %s44, 1
        %s178 = smul.addr %s177, 8
        %s179 = scalar_lea.vmem [#allocation2], %s178
        // Predicated region
        $region29: #{tpu_custom_call.1} parent=27 // pred_check
          %p180 = pneg %p57
        $region30: #{tpu_custom_call.1} parent=27 // pred_check_branch
          %182 = sbr.rel (%p180) target = $region32
        $region31: #{tpu_custom_call.1} parent=27 // pred_region
          %183 = dma.done %s176, 128
        $region32: #{tpu_custom_call.1} parent=27 // pred_fallthru
          _
        %s184 = sand.u32 %s70, 1
        %s185 = scalar_lea.sflag [#allocation6], %s184
        %s186 = sand.u32 %s70, 1
        %s187 = smul.addr %s186, 8
        %s188 = scalar_lea.vmem [#allocation5], %s187
        // Predicated region
        $region33: #{tpu_custom_call.1} parent=27 // pred_check
          %p189 = pneg %p83
        $region34: #{tpu_custom_call.1} parent=27 // pred_check_branch
          %191 = sbr.rel (%p189) target = $region36
        $region35: #{tpu_custom_call.1} parent=27 // pred_region
          %192 = dma.done %s185, 128
        $region36: #{tpu_custom_call.1} parent=27 // pred_fallthru
          _
        %s193 = sand.u32 %s44, 1
        %s194 = scalar_lea.sflag [#allocation3], %s193
        %s195 = sand.u32 %s44, 1
        %s196 = smul.addr %s195, 8
        %s197 = scalar_lea.vmem [#allocation2], %s196
        %p198 = pneg %p57
        %p199 = pneg %p54
        %s200 = sand.u32 %s70, 1
        %s201 = scalar_lea.sflag [#allocation6], %s200
        %s202 = sand.u32 %s70, 1
        %s203 = smul.addr %s202, 8
        %s204 = scalar_lea.vmem [#allocation5], %s203
        %p205 = pneg %p83
        %p206 = pneg %p80
        %p207 = pneg %p111
        %p208 = pneg %p108
        %s209 = sand.u32 %s98, 1
        %s210 = scalar_lea.sflag [#allocation4], %s209
        %s211 = sand.u32 %s98, 1
        %s212 = smul.addr %s211, 8
        %s213 = scalar_lea.vmem [#allocation7], %s212
        %v214 = vld [vmem:[%s179] sm:$0xff]
        %v215 = vld [vmem:[%s188] sm:$0x1]
        %v216 = vld [vmem:[%s188 + $0x1] sm:$0x1]
        %v217 = vld [vmem:[%s188 + $0x2] sm:$0x1]
        %v218 = vld [vmem:[%s188 + $0x3] sm:$0x1]
        %v219 = vld [vmem:[%s188 + $0x4] sm:$0x1]
        %v220 = vld [vmem:[%s188 + $0x5] sm:$0x1]
        %v221 = vlaneseq
        %v222 = vshrl.u32 %v221, 7
        %v223 = vsub.s32 0, %v222
        %v224 = vrot.slane %v218, %v223
        %v225 = vmul.f32 %v214, %v224
        %v226 = vmul.f32 %v225, 1.442695
        %v227 = vpow.pop %v226
        %v228 = vlaneseq
        %v229 = vshrl.u32 %v228, 7
        %v230 = vsub.s32 0, %v229
        %v231 = vrot.slane %v216, %v230
        %v232 = vmul.f32 %v231, %v227
        %v233 = vand.u32 2147483647, %v214
        %v234 = vlog2.pop %v233
        %v235 = vmul.f32 %v234, 0.6931472
        %v236 = vlaneseq
        %v237 = vshrl.u32 %v236, 7
        %v238 = vsub.s32 0, %v237
        %v239 = vrot.slane %v217, %v238
        %v240 = vmul.f32 %v239, %v235
        %v241 = vmul.f32 %v240, 1.442695
        %v242 = vpow.pop %v241
        %vm243 = vcmp.lt.f32.partialorder %v214, 0.0
        %v244 = vlaneseq
        %v245 = vshrl.u32 %v244, 7
        %v246 = vsub.s32 0, %v245
        %v247 = vrot.slane %v219, %v246
        %v248 = vlaneseq
        %v249 = vshrl.u32 %v248, 7
        %v250 = vsub.s32 0, %v249
        %v251 = vrot.slane %v215, %v250
        %v252 = vsel %vm243, %v247, %v251
        %vm253 = vcmp.eq.f32.partialorder %v214, 0.0
        %v254 = vmul.f32 %v242, %v252
        %v255 = vlaneseq
        %v256 = vshrl.u32 %v255, 7
        %v257 = vsub.s32 0, %v256
        %v258 = vrot.slane %v220, %v257
        %v259 = vsel %vm253, %v258, %v254
        %v260 = vadd.f32 %v214, %v259
        %v261 = vadd.f32 %v260, %v232
        %262 = vst [vmem:[%s213] sm:$0xff] %v261
        %s263 = sand.u32 %s98, 1
        %s264 = scalar_lea.sflag [#allocation4], %s263
        %s265 = sand.u32 %s98, 1
        %s266 = smul.addr %s265, 8
        %s267 = scalar_lea.vmem [#allocation7], %s266
        // Predicated region
        $region37: #{tpu_custom_call.1} parent=27 // pred_check
          %p268 = pneg %p108
        $region38: #{tpu_custom_call.1} parent=27 // pred_check_branch
          %270 = sbr.rel (%p268) target = $region40
        $region39: #{tpu_custom_call.1} parent=27 // pred_region
          %s272 = ssub.s32 128, 128
          %273 = vsyncadd %s264, %s272
          %s274 = smul.addr %s27, 2
          %s275 = sadd.s32 %s26, %s274
          %s276 = smul.addr %s275, 128
          %s277 = scalar_lea.hbm %s2, %s276
          %s279 = sshll.u32 %s267, 4
          %s280 = int_to_ptr.vmem [resolvable:$true] %s279
          %282 = dma.vmem_to_hbm [thread:$0]  %s280, 128, %s277, %s264
        $region40: #{tpu_custom_call.1} parent=27 // pred_fallthru
          _
      $region28: #{tpu_custom_call.1} parent=5 // pred_fallthru
        _
      %p283 = scmp.le.s32.totalorder 2, %s17
      // Predicated region
      $region41: #{tpu_custom_call.1} parent=5 // pred_check
        %p284 = pneg %p283
      $region42: #{tpu_custom_call.1} parent=5 // pred_check_branch
        %286 = sbr.rel (%p284) target = $region44
      $region43: #{tpu_custom_call.1} parent=5 // pred_region
        %s287 = ssub.s32 %s17, 2
        // Predicated region
        $region45: #{tpu_custom_call.1} parent=43 // pred_check
          %p288 = pneg %p114
        $region46: #{tpu_custom_call.1} parent=43 // pred_check_branch
          %290 = sbr.rel (%p288) target = $region48
        $region47: #{tpu_custom_call.1} parent=43 // pred_region
          %s291 = sand.u32 %s99, 1
          %s292 = scalar_lea.sflag [#allocation4], %s291
          %s293 = sand.u32 %s99, 1
          %s294 = smul.addr %s293, 8
          %s295 = scalar_lea.vmem [#allocation7], %s294
          %296 = dma.done %s292, 128
        $region48: #{tpu_custom_call.1} parent=43 // pred_fallthru
          _
      $region44: #{tpu_custom_call.1} parent=5 // pred_fallthru
        _
    $region6: #{tpu_custom_call.1} parent=1 // loop_footer
      %s21 = sadd.s32 1, %s17
    $region7: #{tpu_custom_call.1} parent=1 // loop_footer_branch
      %16 = sbr.rel target = $region3
    $region8: #{tpu_custom_call.1} parent=1 // loop_exit
      _
    %297 = vsyncpa [#allocation3], 1
    %s298 = scalar_lea.sflag [#allocation3], 1
    %299 = vsyncpa %s298, 1
    %300 = vsyncpa [#allocation6], 1
    %s301 = scalar_lea.sflag [#allocation6], 1
    %302 = vsyncpa %s301, 1
    %303 = vsyncpa [#allocation4], 1
    %s304 = scalar_lea.sflag [#allocation4], 1
    %305 = vsyncpa %s304, 1

</llo_original>
